<compile_context>
chip_gen: v7x
topology: tpu7x:2x2x1
jax: 0.10.0
libtpu: 0.0.40
codegen_flags: <defaults>
</compile_context>

<pallas_src>
import functools

import jax
import jax.numpy as jnp
import numpy as np
from jax.experimental import pallas as pl
from jax.experimental.pallas import tpu as pltpu

LANES = 128          # lane-padded feature width for every layer
IN_DIM = 20
HID_DIM = 100
N_PRELU = 6          # fc1, fc2, fc4, fc5, fc6, fc7 (fc3 has no PReLU)
LAYER_ORDER = ["1", "2", "4", "5", "6", "7", "3"]
N_LAYERS = len(LAYER_ORDER)


def _round_up(x, m):
    return (x + m - 1) // m * m


# ---------------------------------------------------------------------------
# Kernel: the whole 7-layer forward for one (TB, 128) batch tile.
# ---------------------------------------------------------------------------
def mlp_kernel(x_ref, w_ref, b_ref, a_ref, o_ref):
    """x_ref:(TB,128) compute-dtype  w_ref:(7,128,128) compute-dtype
       b_ref:(7,128) f32             a_ref:(6,128) f32   o_ref:(TB,128) f32"""
    tb = x_ref.shape[0]
    # Two independent half-tile chains (when the tile is big enough) so the
    # scheduler can overlap one half's PReLU (VPU) with the other half's
    # matmul (MXU) and hide MXU result-drain latency.  Semantically identical.
    n_half = 2 if (tb >= 32 and tb % 32 == 0) else 1
    half = tb // n_half

    hs = [x_ref[p * half:(p + 1) * half, :] for p in range(n_half)]
    for l in range(N_PRELU):                          # short fixed loop -> unrolled
        w = w_ref[l]
        b = b_ref[l:l + 1, :]
        a = a_ref[l:l + 1, :]
        ys = [jnp.dot(h, w, preferred_element_type=jnp.float32) + b for h in hs]
        # per-channel PReLU in f32 on the VPU; cast back to the MXU-feed dtype
        hs = [jnp.where(y > 0.0, y, a * y).astype(x_ref.dtype) for y in ys]

    # drop3: nn.Dropout(0.5) is identity at inference.
    # TODO(synk): training-mode dropout would need pltpu.prng_seed /
    # prng_random_bits masking plus the 1/0.5 rescale.
    w = w_ref[N_PRELU]
    b = b_ref[N_PRELU:N_PRELU + 1, :]
    for p, h in enumerate(hs):
        o_ref[p * half:(p + 1) * half, :] = (
            jnp.dot(h, w, preferred_element_type=jnp.float32) + b
        ).astype(o_ref.dtype)


# ---------------------------------------------------------------------------
# Tiling choice: one big tile when the batch fits, else an even step count.
# ---------------------------------------------------------------------------
def _choose_tiling(batch, sub, max_batch_tile):
    b_al = _round_up(max(batch, 1), sub)
    if b_al <= max_batch_tile:
        return b_al, 1                       # whole batch, single grid step
    n_steps = -(-b_al // max_batch_tile)
    if n_steps % 2:                          # even step count -> both v7x TCs busy
        n_steps += 1
    tb = _round_up(-(-b_al // n_steps), sub)
    return tb, n_steps


# ---------------------------------------------------------------------------
# Wrapper: padding, batch tiling, pallas_call.
# ---------------------------------------------------------------------------
def net_forward(x, packed, anchors, *, max_batch_tile=2048,
                compute_dtype=jnp.bfloat16):
    """Run the Net forward pass. Returns (B, anchors+1) float32."""
    w_all, b_all, a_all = packed
    if w_all.dtype != np.dtype(compute_dtype):
        raise ValueError(
            f"packed weight dtype {w_all.dtype} must equal compute_dtype "
            f"{np.dtype(compute_dtype)}; otherwise jnp.dot silently promotes "
            "off the bf16 MXU path. Repack with pack_params(weight_dtype=...).")

    B, F = x.shape
    # bf16 packs 16 sublanes per vreg, f32 packs 8 -> round tiles accordingly.
    sub = 16 if np.dtype(compute_dtype) == np.dtype(jnp.bfloat16) else 8
    TB, n_steps = _choose_tiling(B, sub, max_batch_tile)
    Bp = TB * n_steps

    # Zero-pad activations: batch -> Bp rows, features 20 -> 128 lanes.
    # (Single cheap XLA op; jit the wrapper so it fuses around the kernel.)
    # TODO(synk): on v5e a 32-lane input (20->32) with a special-cased (32,128)
    # fc1 weight would cut input DMA a further 4x; skipped to keep one uniform
    # (7,128,128) weight stack.
    x_p = jnp.pad(x.astype(compute_dtype), ((0, Bp - B), (0, LANES - F)))

    itemsize = np.dtype(compute_dtype).itemsize
    cost = pl.CostEstimate(
        flops=2 * Bp * LANES * LANES * N_LAYERS + 4 * Bp * LANES * N_PRELU,
        transcendentals=0,
        bytes_accessed=(Bp * LANES * itemsize            # activations in
                        + Bp * LANES * 4                 # f32 output
                        + w_all.size * itemsize
                        + (b_all.size + a_all.size) * 4),
    )

    out = pl.pallas_call(
        mlp_kernel,
        out_shape=jax.ShapeDtypeStruct((Bp, LANES), jnp.float32),
        grid=(n_steps,),
        in_specs=[
            # activation tile: new block per grid step (double-buffered by Pallas)
            pl.BlockSpec((TB, LANES), lambda i: (i, 0)),
            # weights / biases / alphas: constant index_map -> VMEM-resident,
            # copied once (Mosaic skips re-DMA of unchanged blocks). Total
            # resident weight footprint is < 0.5 MiB, trivially within VMEM.
            pl.BlockSpec(w_all.shape, lambda i: (0, 0, 0)),
            pl.BlockSpec(b_all.shape, lambda i: (0, 0)),
            pl.BlockSpec(a_all.shape, lambda i: (0, 0)),
        ],
        out_specs=pl.BlockSpec((TB, LANES), lambda i: (i, 0)),
        compiler_params=pltpu.CompilerParams(
            dimension_semantics=("parallel",)),   # batch axis -> both v7x TCs
        cost_estimate=cost,
    )(x_p, w_all, b_all, a_all)

    # Slice lane-dense output back to the logical (B, anchors+1).
    return out[:B, :anchors + 1]


# ---------------------------------------------------------------------------
# Parameter construction / packing.
# ---------------------------------------------------------------------------
def init_params(key, anchors):
    """Deterministic PyTorch-style init: U(-1/sqrt(fan_in), 1/sqrt(fan_in)).
    Weights stored as (in, out) = W.T; biases/alphas as (1, out)."""
    layer_dims = {
        "1": (IN_DIM, HID_DIM),
        "2": (HID_DIM, HID_DIM),
        "4": (HID_DIM, HID_DIM),
        "5": (HID_DIM, HID_DIM),
        "6": (HID_DIM, HID_DIM),
        "7": (HID_DIM, HID_DIM),
        "3": (HID_DIM, anchors + 1),
    }
    params = {}
    for name, (fin, fout) in layer_dims.items():
        key, kw, kb = jax.random.split(key, 3)
        bound = 1.0 / (fin ** 0.5)
        params[f"w{name}"] = jax.random.uniform(
            kw, (fin, fout), jnp.float32, -bound, bound)
        params[f"b{name}"] = jax.random.uniform(
            kb, (1, fout), jnp.float32, -bound, bound)
        if name != "3":
            params[f"a{name}"] = jnp.full((1, fout), 0.25, jnp.float32)
    return params


def pack_params(params, *, weight_dtype=jnp.bfloat16):
    """Zero-pad every layer to 128x128 and stack into 3 arrays:
       w_all (7,128,128) weight_dtype, b_all (7,128) f32, a_all (6,128) f32.
       Layer order: fc1, fc2, fc4, fc5, fc6, fc7, fc3."""
    w_all = jnp.zeros((N_LAYERS, LANES, LANES), weight_dtype)
    b_all = jnp.zeros((N_LAYERS, LANES), jnp.float32)
    a_all = jnp.zeros((N_PRELU, LANES), jnp.float32)
    for l, name in enumerate(LAYER_ORDER):
        w = params[f"w{name}"]
        b = params[f"b{name}"].reshape(-1)
        w_all = w_all.at[l, :w.shape[0], :w.shape[1]].set(w.astype(weight_dtype))
        b_all = b_all.at[l, :b.shape[0]].set(b)
        if name != "3":
            a = params[f"a{name}"].reshape(-1)
            a_all = a_all.at[l, :a.shape[0]].set(a)
    return w_all, b_all, a_all


def _reference_forward(x, params):
    """Pure-JAX reference (same math, unpadded) for correctness checking."""
    h = x.astype(jnp.float32)
    for name in ["1", "2", "4", "5", "6", "7"]:
        y = h @ params[f"w{name}"] + params[f"b{name}"]
        h = jnp.where(y > 0.0, y, params[f"a{name}"] * y)
    return h @ params["w3"] + params["b3"]


if __name__ == "__main__":
    key = jax.random.PRNGKey(0)
    k_params, k_x1, k_x2 = jax.random.split(key, 3)

    anchors = 7          # -> output dim anchors + 1 = 8
    params = init_params(k_params, anchors)

    x_small = jax.random.normal(k_x1, (8, IN_DIM), dtype=jnp.float32)
    x_split = jax.random.normal(k_x2, (60, IN_DIM), dtype=jnp.float32)  # exercises
    # row padding (60 -> 64) and the in-kernel half-tile interleave (TB=64).

    ref_small = _reference_forward(x_small, params)
    ref_split = _reference_forward(x_split, params)

    # --- exact-parity f32 path ---------------------------------------------
    packed_f32 = pack_params(params, weight_dtype=jnp.float32)
    fwd_f32 = jax.jit(functools.partial(net_forward, anchors=anchors,
                                        compute_dtype=jnp.float32))
    out_small = jax.block_until_ready(fwd_f32(x_small, packed_f32))
    assert out_small.shape == (8, anchors + 1)
    assert jnp.allclose(out_small, ref_small, atol=1e-4, rtol=1e-4), \
        float(jnp.max(jnp.abs(out_small - ref_small)))

    out_split = jax.block_until_ready(fwd_f32(x_split, packed_f32))
    assert out_split.shape == (60, anchors + 1)
    assert jnp.allclose(out_split, ref_split, atol=1e-4, rtol=1e-4), \
        float(jnp.max(jnp.abs(out_split - ref_split)))

    # --- default bf16 fast path (MXU-native on v6e/v7x, f32 accumulation) ---
    packed_bf16 = pack_params(params)                  # bf16 weights
    fwd_bf16 = jax.jit(functools.partial(net_forward, anchors=anchors))
    out_bf16 = jax.block_until_ready(fwd_bf16(x_small, packed_bf16))
    assert out_bf16.shape == (8, anchors + 1)
    assert jnp.allclose(out_bf16, ref_small, atol=1e-1, rtol=1e-1), \
        float(jnp.max(jnp.abs(out_bf16 - ref_small)))

    print("KERNEL_OK")
</pallas_src>

<mosaic_0001>
module attributes {stable_mosaic.version = 11 : i64} {
  func.func @mlp_kernel(%arg0: i32, %arg1: memref<8x128xf32, #tpu.memory_space<vmem>>, %arg2: memref<7x128x128xf32, #tpu.memory_space<vmem>>, %arg3: memref<7x128xf32, #tpu.memory_space<vmem>>, %arg4: memref<6x128xf32, #tpu.memory_space<vmem>>, %arg5: memref<8x128xf32, #tpu.memory_space<vmem>>) attributes {dimension_semantics = [#tpu.dimension_semantics<parallel>], iteration_bounds = array<i64: 1>, scalar_prefetch = 0 : i64, scratch_operands = 0 : i64, tpu.core_type = #tpu.core_type<tc>, window_params = [{transform_indices = @transform_0, window_bounds = array<i64: 8, 128>}, {pipeline_mode = #tpu.pipeline_mode<synchronous>, transform_indices = @transform_1, window_bounds = array<i64: 7, 128, 128>}, {pipeline_mode = #tpu.pipeline_mode<synchronous>, transform_indices = @transform_2, window_bounds = array<i64: 7, 128>}, {pipeline_mode = #tpu.pipeline_mode<synchronous>, transform_indices = @transform_3, window_bounds = array<i64: 6, 128>}, {transform_indices = @transform_4, window_bounds = array<i64: 8, 128>}]} {
    %c0 = arith.constant 0 : index
    %c0_0 = arith.constant 0 : index
    %0 = vector.load %arg1[%c0, %c0_0] : memref<8x128xf32, #tpu.memory_space<vmem>>, vector<8x128xf32>
    %c0_1 = arith.constant 0 : index
    %c0_2 = arith.constant 0 : index
    %c0_3 = arith.constant 0 : index
    %1 = vector.load %arg2[%c0_1, %c0_2, %c0_3] : memref<7x128x128xf32, #tpu.memory_space<vmem>>, vector<1x128x128xf32>
    %2 = vector.shape_cast %1 : vector<1x128x128xf32> to vector<128x128xf32>
    %c0_4 = arith.constant 0 : index
    %c0_5 = arith.constant 0 : index
    %3 = vector.load %arg3[%c0_4, %c0_5] : memref<7x128xf32, #tpu.memory_space<vmem>>, vector<1x128xf32>
    %c0_6 = arith.constant 0 : index
    %c0_7 = arith.constant 0 : index
    %4 = vector.load %arg4[%c0_6, %c0_7] : memref<6x128xf32, #tpu.memory_space<vmem>>, vector<1x128xf32>
    %cst = arith.constant dense<0.000000e+00> : vector<8x128xf32>
    %5 = tpu.matmul %0, %2, %cst {dimension_numbers = #tpu.dot_dimension_numbers<[1], [0], [0], [1], [0, 0, 1, 1], [], []>} : vector<8x128xf32>, vector<128x128xf32>, vector<8x128xf32> -> vector<8x128xf32>
    %6 = vector.broadcast %3 : vector<1x128xf32> to vector<8x128xf32>
    %7 = arith.addf %5, %6 : vector<8x128xf32>
    %cst_8 = arith.constant 0.000000e+00 : f32
    %8 = vector.broadcast %cst_8 : f32 to vector<8x128xf32>
    %9 = arith.cmpf ogt, %7, %8 : vector<8x128xf32>
    %10 = vector.broadcast %4 : vector<1x128xf32> to vector<8x128xf32>
    %11 = arith.mulf %10, %7 : vector<8x128xf32>
    %12 = arith.select %9, %7, %11 : vector<8x128xi1>, vector<8x128xf32>
    %c1 = arith.constant 1 : index
    %c0_9 = arith.constant 0 : index
    %c0_10 = arith.constant 0 : index
    %13 = vector.load %arg2[%c1, %c0_9, %c0_10] : memref<7x128x128xf32, #tpu.memory_space<vmem>>, vector<1x128x128xf32>
    %14 = vector.shape_cast %13 : vector<1x128x128xf32> to vector<128x128xf32>
    %c1_11 = arith.constant 1 : index
    %c0_12 = arith.constant 0 : index
    %15 = vector.load %arg3[%c1_11, %c0_12] : memref<7x128xf32, #tpu.memory_space<vmem>>, vector<1x128xf32>
    %c1_13 = arith.constant 1 : index
    %c0_14 = arith.constant 0 : index
    %16 = vector.load %arg4[%c1_13, %c0_14] : memref<6x128xf32, #tpu.memory_space<vmem>>, vector<1x128xf32>
    %cst_15 = arith.constant dense<0.000000e+00> : vector<8x128xf32>
    %17 = tpu.matmul %12, %14, %cst_15 {dimension_numbers = #tpu.dot_dimension_numbers<[1], [0], [0], [1], [0, 0, 1, 1], [], []>} : vector<8x128xf32>, vector<128x128xf32>, vector<8x128xf32> -> vector<8x128xf32>
    %18 = vector.broadcast %15 : vector<1x128xf32> to vector<8x128xf32>
    %19 = arith.addf %17, %18 : vector<8x128xf32>
    %cst_16 = arith.constant 0.000000e+00 : f32
    %20 = vector.broadcast %cst_16 : f32 to vector<8x128xf32>
    %21 = arith.cmpf ogt, %19, %20 : vector<8x128xf32>
    %22 = vector.broadcast %16 : vector<1x128xf32> to vector<8x128xf32>
    %23 = arith.mulf %22, %19 : vector<8x128xf32>
    %24 = arith.select %21, %19, %23 : vector<8x128xi1>, vector<8x128xf32>
    %c2 = arith.constant 2 : index
    %c0_17 = arith.constant 0 : index
    %c0_18 = arith.constant 0 : index
    %25 = vector.load %arg2[%c2, %c0_17, %c0_18] : memref<7x128x128xf32, #tpu.memory_space<vmem>>, vector<1x128x128xf32>
    %26 = vector.shape_cast %25 : vector<1x128x128xf32> to vector<128x128xf32>
    %c2_19 = arith.constant 2 : index
    %c0_20 = arith.constant 0 : index
    %27 = vector.load %arg3[%c2_19, %c0_20] : memref<7x128xf32, #tpu.memory_space<vmem>>, vector<1x128xf32>
    %c2_21 = arith.constant 2 : index
    %c0_22 = arith.constant 0 : index
    %28 = vector.load %arg4[%c2_21, %c0_22] : memref<6x128xf32, #tpu.memory_space<vmem>>, vector<1x128xf32>
    %cst_23 = arith.constant dense<0.000000e+00> : vector<8x128xf32>
    %29 = tpu.matmul %24, %26, %cst_23 {dimension_numbers = #tpu.dot_dimension_numbers<[1], [0], [0], [1], [0, 0, 1, 1], [], []>} : vector<8x128xf32>, vector<128x128xf32>, vector<8x128xf32> -> vector<8x128xf32>
    %30 = vector.broadcast %27 : vector<1x128xf32> to vector<8x128xf32>
    %31 = arith.addf %29, %30 : vector<8x128xf32>
    %cst_24 = arith.constant 0.000000e+00 : f32
    %32 = vector.broadcast %cst_24 : f32 to vector<8x128xf32>
    %33 = arith.cmpf ogt, %31, %32 : vector<8x128xf32>
    %34 = vector.broadcast %28 : vector<1x128xf32> to vector<8x128xf32>
    %35 = arith.mulf %34, %31 : vector<8x128xf32>
    %36 = arith.select %33, %31, %35 : vector<8x128xi1>, vector<8x128xf32>
    %c3 = arith.constant 3 : index
    %c0_25 = arith.constant 0 : index
    %c0_26 = arith.constant 0 : index
    %37 = vector.load %arg2[%c3, %c0_25, %c0_26] : memref<7x128x128xf32, #tpu.memory_space<vmem>>, vector<1x128x128xf32>
    %38 = vector.shape_cast %37 : vector<1x128x128xf32> to vector<128x128xf32>
    %c3_27 = arith.constant 3 : index
    %c0_28 = arith.constant 0 : index
    %39 = vector.load %arg3[%c3_27, %c0_28] : memref<7x128xf32, #tpu.memory_space<vmem>>, vector<1x128xf32>
    %c3_29 = arith.constant 3 : index
    %c0_30 = arith.constant 0 : index
    %40 = vector.load %arg4[%c3_29, %c0_30] : memref<6x128xf32, #tpu.memory_space<vmem>>, vector<1x128xf32>
    %cst_31 = arith.constant dense<0.000000e+00> : vector<8x128xf32>
    %41 = tpu.matmul %36, %38, %cst_31 {dimension_numbers = #tpu.dot_dimension_numbers<[1], [0], [0], [1], [0, 0, 1, 1], [], []>} : vector<8x128xf32>, vector<128x128xf32>, vector<8x128xf32> -> vector<8x128xf32>
    %42 = vector.broadcast %39 : vector<1x128xf32> to vector<8x128xf32>
    %43 = arith.addf %41, %42 : vector<8x128xf32>
    %cst_32 = arith.constant 0.000000e+00 : f32
    %44 = vector.broadcast %cst_32 : f32 to vector<8x128xf32>
    %45 = arith.cmpf ogt, %43, %44 : vector<8x128xf32>
    %46 = vector.broadcast %40 : vector<1x128xf32> to vector<8x128xf32>
    %47 = arith.mulf %46, %43 : vector<8x128xf32>
    %48 = arith.select %45, %43, %47 : vector<8x128xi1>, vector<8x128xf32>
    %c4 = arith.constant 4 : index
    %c0_33 = arith.constant 0 : index
    %c0_34 = arith.constant 0 : index
    %49 = vector.load %arg2[%c4, %c0_33, %c0_34] : memref<7x128x128xf32, #tpu.memory_space<vmem>>, vector<1x128x128xf32>
    %50 = vector.shape_cast %49 : vector<1x128x128xf32> to vector<128x128xf32>
    %c4_35 = arith.constant 4 : index
    %c0_36 = arith.constant 0 : index
    %51 = vector.load %arg3[%c4_35, %c0_36] : memref<7x128xf32, #tpu.memory_space<vmem>>, vector<1x128xf32>
    %c4_37 = arith.constant 4 : index
    %c0_38 = arith.constant 0 : index
    %52 = vector.load %arg4[%c4_37, %c0_38] : memref<6x128xf32, #tpu.memory_space<vmem>>, vector<1x128xf32>
    %cst_39 = arith.constant dense<0.000000e+00> : vector<8x128xf32>
    %53 = tpu.matmul %48, %50, %cst_39 {dimension_numbers = #tpu.dot_dimension_numbers<[1], [0], [0], [1], [0, 0, 1, 1], [], []>} : vector<8x128xf32>, vector<128x128xf32>, vector<8x128xf32> -> vector<8x128xf32>
    %54 = vector.broadcast %51 : vector<1x128xf32> to vector<8x128xf32>
    %55 = arith.addf %53, %54 : vector<8x128xf32>
    %cst_40 = arith.constant 0.000000e+00 : f32
    %56 = vector.broadcast %cst_40 : f32 to vector<8x128xf32>
    %57 = arith.cmpf ogt, %55, %56 : vector<8x128xf32>
    %58 = vector.broadcast %52 : vector<1x128xf32> to vector<8x128xf32>
    %59 = arith.mulf %58, %55 : vector<8x128xf32>
    %60 = arith.select %57, %55, %59 : vector<8x128xi1>, vector<8x128xf32>
    %c5 = arith.constant 5 : index
    %c0_41 = arith.constant 0 : index
    %c0_42 = arith.constant 0 : index
    %61 = vector.load %arg2[%c5, %c0_41, %c0_42] : memref<7x128x128xf32, #tpu.memory_space<vmem>>, vector<1x128x128xf32>
    %62 = vector.shape_cast %61 : vector<1x128x128xf32> to vector<128x128xf32>
    %c5_43 = arith.constant 5 : index
    %c0_44 = arith.constant 0 : index
    %63 = vector.load %arg3[%c5_43, %c0_44] : memref<7x128xf32, #tpu.memory_space<vmem>>, vector<1x128xf32>
    %c5_45 = arith.constant 5 : index
    %c0_46 = arith.constant 0 : index
    %64 = vector.load %arg4[%c5_45, %c0_46] : memref<6x128xf32, #tpu.memory_space<vmem>>, vector<1x128xf32>
    %cst_47 = arith.constant dense<0.000000e+00> : vector<8x128xf32>
    %65 = tpu.matmul %60, %62, %cst_47 {dimension_numbers = #tpu.dot_dimension_numbers<[1], [0], [0], [1], [0, 0, 1, 1], [], []>} : vector<8x128xf32>, vector<128x128xf32>, vector<8x128xf32> -> vector<8x128xf32>
    %66 = vector.broadcast %63 : vector<1x128xf32> to vector<8x128xf32>
    %67 = arith.addf %65, %66 : vector<8x128xf32>
    %cst_48 = arith.constant 0.000000e+00 : f32
    %68 = vector.broadcast %cst_48 : f32 to vector<8x128xf32>
    %69 = arith.cmpf ogt, %67, %68 : vector<8x128xf32>
    %70 = vector.broadcast %64 : vector<1x128xf32> to vector<8x128xf32>
    %71 = arith.mulf %70, %67 : vector<8x128xf32>
    %72 = arith.select %69, %67, %71 : vector<8x128xi1>, vector<8x128xf32>
    %c6 = arith.constant 6 : index
    %c0_49 = arith.constant 0 : index
    %c0_50 = arith.constant 0 : index
    %73 = vector.load %arg2[%c6, %c0_49, %c0_50] : memref<7x128x128xf32, #tpu.memory_space<vmem>>, vector<1x128x128xf32>
    %74 = vector.shape_cast %73 : vector<1x128x128xf32> to vector<128x128xf32>
    %c6_51 = arith.constant 6 : index
    %c0_52 = arith.constant 0 : index
    %75 = vector.load %arg3[%c6_51, %c0_52] : memref<7x128xf32, #tpu.memory_space<vmem>>, vector<1x128xf32>
    %cst_53 = arith.constant dense<0.000000e+00> : vector<8x128xf32>
    %76 = tpu.matmul %72, %74, %cst_53 {dimension_numbers = #tpu.dot_dimension_numbers<[1], [0], [0], [1], [0, 0, 1, 1], [], []>} : vector<8x128xf32>, vector<128x128xf32>, vector<8x128xf32> -> vector<8x128xf32>
    %77 = vector.broadcast %75 : vector<1x128xf32> to vector<8x128xf32>
    %78 = arith.addf %76, %77 : vector<8x128xf32>
    %c0_54 = arith.constant 0 : index
    %c0_55 = arith.constant 0 : index
    %79 = vector.load %arg5[%c0_54, %c0_55] : memref<8x128xf32, #tpu.memory_space<vmem>>, vector<8x128xf32>
    tpu.vector_store %arg5[%c0_54, %c0_55], %78 {strides = array<i32>} : memref<8x128xf32, #tpu.memory_space<vmem>>, vector<8x128xf32>,
    return
  }
  func.func @transform_0(%arg0: i32) -> (i32, i32) {
    %c0_i32 = arith.constant 0 : i32
    %c0_i32_0 = arith.constant 0 : i32
    return %arg0, %c0_i32 : i32, i32
  }
  func.func @transform_1(%arg0: i32) -> (i32, i32, i32) {
    %c0_i32 = arith.constant 0 : i32
    %c0_i32_0 = arith.constant 0 : i32
    %c0_i32_1 = arith.constant 0 : i32
    %c0_i32_2 = arith.constant 0 : i32
    return %c0_i32, %c0_i32_0, %c0_i32_1 : i32, i32, i32
  }
  func.func @transform_2(%arg0: i32) -> (i32, i32) {
    %c0_i32 = arith.constant 0 : i32
    %c0_i32_0 = arith.constant 0 : i32
    %c0_i32_1 = arith.constant 0 : i32
    return %c0_i32, %c0_i32_0 : i32, i32
  }
  func.func @transform_3(%arg0: i32) -> (i32, i32) {
    %c0_i32 = arith.constant 0 : i32
    %c0_i32_0 = arith.constant 0 : i32
    %c0_i32_1 = arith.constant 0 : i32
    return %c0_i32, %c0_i32_0 : i32, i32
  }
  func.func @transform_4(%arg0: i32) -> (i32, i32) {
    %c0_i32 = arith.constant 0 : i32
    %c0_i32_0 = arith.constant 0 : i32
    return %arg0, %c0_i32 : i32, i32
  }
}

</mosaic_0001>

<llo_original>
// kernel: net_forward.1
$region0: #{net_forward.1}
  #allocation0 [shape = 'u32[]', space=smem, size = 0x4, offset = 0x4, fixed_abs, tag = 'smem constant byte address 0x4 - core index']
  #allocation1 [shape = 'u32[144,128]{1,0:T(1,128)}', space=vmem, size = 0x12000, scoped, tag = 'internal scratch']
  %s0 = inlined_call_operand.vmem [shape: f32[8,128], index: 0, kind: input, shape index: {}]
  %s1 = inlined_call_operand.hbm [shape: f32[7,128,128], index: 1, kind: input, shape index: {}]
  %s2 = inlined_call_operand.vmem [shape: f32[7,128], index: 2, kind: input, shape index: {}]
  %s3 = inlined_call_operand.vmem [shape: f32[6,128], index: 3, kind: input, shape index: {}]
  %s4 = inlined_call_operand.hbm [shape: f32[8,128], index: 4, kind: output, shape index: {}]
  %s5 = sld [smem:[#allocation0]]
  $region30: #{net_forward.1} parent=0
    _
  %s7 = ssub.s32 1, %s5
  %s8 = scalar_select 0, %s7, %s5
  $region1: #{net_forward.1} parent=0
    #allocation2 [shape = 'u8[458752]{0}', space=vmem, size = 0x70000, scoped, tag = 'input window, operand 1, single buffered']
    #allocation3 [shape = 's32[1]{0}', space=sflag, size = 0x4, scoped, tag = 'scoped memory for net_forward.1']
    #allocation4 [shape = 's32[1]{0}', space=sflag, size = 0x4, scoped, tag = 'scoped memory for net_forward.1']
    #allocation5 [shape = 'u8[4096]{0}', space=vmem, size = 0x1000, scoped, tag = 'output window, operand 0, single buffered']
    %9 = vsyncpa [#allocation3], 0
    %10 = vsyncpa [#allocation4], 0
    // Predicated region
    $region2: #{net_forward.1} parent=1 // pred_check
      _
    $region3: #{net_forward.1} parent=1 // pred_check_branch
      %12 = sbr.rel (0) target = $region5
    $region4: #{net_forward.1} parent=1 // pred_region
      _
    $region5: #{net_forward.1} parent=1 // pred_fallthru
      _
    // Predicated region
    $region6: #{net_forward.1} parent=1 // pred_check
      _
    $region7: #{net_forward.1} parent=1 // pred_check_branch
      %14 = sbr.rel (0) target = $region9
    $region8: #{net_forward.1} parent=1 // pred_region
      %s16 = ssub.s32 14336, 14336
      %17 = vsyncadd [#allocation3], %s16
      %s18 = sshll.u32 [#allocation2], 4
      %s19 = int_to_ptr.vmem [resolvable:$true] %s18
      %24 = dma.hbm_to_vmem [thread:$0]  %s1, 14336, %s19, [#allocation3], 128, 128, 8
    $region9: #{net_forward.1} parent=1 // pred_fallthru
      _
    // Predicated region
    $region10: #{net_forward.1} parent=1 // pred_check
      _
    $region11: #{net_forward.1} parent=1 // pred_check_branch
      %26 = sbr.rel (0) target = $region13
    $region12: #{net_forward.1} parent=1 // pred_region
      _
    $region13: #{net_forward.1} parent=1 // pred_fallthru
      _
    // Predicated region
    $region14: #{net_forward.1} parent=1 // pred_check
      _
    $region15: #{net_forward.1} parent=1 // pred_check_branch
      %28 = sbr.rel (0) target = $region17
    $region16: #{net_forward.1} parent=1 // pred_region
      _
    $region17: #{net_forward.1} parent=1 // pred_fallthru
      _
    // Predicated region
    $region18: #{net_forward.1} parent=1 // pred_check
      _
    $region19: #{net_forward.1} parent=1 // pred_check_branch
      %30 = sbr.rel (0) target = $region21
    $region20: #{net_forward.1} parent=1 // pred_region
      %31 = dma.done [#allocation3], 14336
    $region21: #{net_forward.1} parent=1 // pred_fallthru
      _
    %v32 = vld [vmem:[%s0] sm:$0xff]
    %v33 = vld [vmem:[#allocation2] sm:$0xff]
    %v34 = vld [vmem:[#allocation2 + $0x8] sm:$0xff]
    %v35 = vld [vmem:[#allocation2 + $0x10] sm:$0xff]
    %v36 = vld [vmem:[#allocation2 + $0x18] sm:$0xff]
    %v37 = vld [vmem:[#allocation2 + $0x20] sm:$0xff]
    %v38 = vld [vmem:[#allocation2 + $0x28] sm:$0xff]
    %v39 = vld [vmem:[#allocation2 + $0x30] sm:$0xff]
    %v40 = vld [vmem:[#allocation2 + $0x38] sm:$0xff]
    %v41 = vld [vmem:[#allocation2 + $0x40] sm:$0xff]
    %v42 = vld [vmem:[#allocation2 + $0x48] sm:$0xff]
    %v43 = vld [vmem:[#allocation2 + $0x50] sm:$0xff]
    %v44 = vld [vmem:[#allocation2 + $0x58] sm:$0xff]
    %v45 = vld [vmem:[#allocation2 + $0x60] sm:$0xff]
    %v46 = vld [vmem:[#allocation2 + $0x68] sm:$0xff]
    %v47 = vld [vmem:[#allocation2 + $0x70] sm:$0xff]
    %v48 = vld [vmem:[#allocation2 + $0x78] sm:$0xff]
    %v49 = vld [vmem:[%s2] sm:$0x1]
    %v50 = vld [vmem:[%s3] sm:$0x1]
    %v51 = vlaneseq
    %v52 = vshrl.u32 %v51, 7
    %v53 = vsub.s32 0, %v52
    %v54 = vrot.slane %v49, %v53
    %55 = vmatprep.subr.mxu0 0.0
    %56 = vmatpush1.msra.mxu0 %v33
    %57 = vmatprep.subr.mxu0 0.0
    %58 = vmatpush1.msra.mxu0 %v34
    %59 = vmatprep.subr.mxu0 0.0
    %60 = vmatpush1.msra.mxu0 %v35
    %61 = vmatprep.subr.mxu0 0.0
    %62 = vmatpush1.msra.mxu0 %v36
    %63 = vmatprep.subr.mxu0 0.0
    %64 = vmatpush1.msra.mxu0 %v37
    %65 = vmatprep.subr.mxu0 0.0
    %66 = vmatpush1.msra.mxu0 %v38
    %67 = vmatprep.subr.mxu0 0.0
    %68 = vmatpush1.msra.mxu0 %v39
    %69 = vmatprep.subr.mxu0 0.0
    %70 = vmatpush1.msra.mxu0 %v40
    %71 = vmatprep.subr.mxu0 0.0
    %72 = vmatpush1.msra.mxu0 %v41
    %73 = vmatprep.subr.mxu0 0.0
    %74 = vmatpush1.msra.mxu0 %v42
    %75 = vmatprep.subr.mxu0 0.0
    %76 = vmatpush1.msra.mxu0 %v43
    %77 = vmatprep.subr.mxu0 0.0
    %78 = vmatpush1.msra.mxu0 %v44
    %79 = vmatprep.subr.mxu0 0.0
    %80 = vmatpush1.msra.mxu0 %v45
    %81 = vmatprep.subr.mxu0 0.0
    %82 = vmatpush1.msra.mxu0 %v46
    %83 = vmatprep.subr.mxu0 0.0
    %84 = vmatpush1.msra.mxu0 %v47
    %85 = vmatprep.subr.mxu0 0.0
    %86 = vmatpush1.msra.mxu0 %v48
    %87 = vmatprep.subr.mxu0 0.0
    %88 = vmatpush1.msra.mxu0 0.0
    %89 = vmatprep.subr.mxu0 0.0
    %90 = vmatpush1.msra.mxu0 0.0
    %91 = vmatprep.subr.mxu0 0.0
    %92 = vmatpush1.msra.mxu0 0.0
    %93 = vmatprep.subr.mxu0 0.0
    %94 = vmatpush1.msra.mxu0 0.0
    %95 = vmatprep.subr.mxu0 0.0
    %96 = vmatpush1.msra.mxu0 0.0
    %97 = vmatprep.subr.mxu0 0.0
    %98 = vmatpush1.msra.mxu0 0.0
    %99 = vmatprep.subr.mxu0 0.0
    %100 = vmatpush1.msra.mxu0 0.0
    %101 = vmatprep.subr.mxu0 0.0
    %102 = vmatpush1.msra.mxu0 0.0
    %103 = vmatprep.subr.mxu0 0.0
    %104 = vmatpush1.msra.mxu0 0.0
    %105 = vmatprep.subr.mxu0 0.0
    %106 = vmatpush1.msra.mxu0 0.0
    %107 = vmatprep.subr.mxu0 0.0
    %108 = vmatpush1.msra.mxu0 0.0
    %109 = vmatprep.subr.mxu0 0.0
    %110 = vmatpush1.msra.mxu0 0.0
    %111 = vmatprep.subr.mxu0 0.0
    %112 = vmatpush1.msra.mxu0 0.0
    %113 = vmatprep.subr.mxu0 0.0
    %114 = vmatpush1.msra.mxu0 0.0
    %115 = vmatprep.subr.mxu0 0.0
    %116 = vmatpush1.msra.mxu0 0.0
    %117 = vmatprep.subr.mxu0 0.0
    %118 = vmatpush1.msra.mxu0 0.0
    %119 = vmatprep.mubr.f32.mxu0 0.0
    %120 = vmatmul.mubr.f32.gmra.mrb[0].mxu0 %v32
    %v121 = vpop.f32.mrb[0].mxu0
    %v122 = vadd.f32 %v54, %v121
    %v123 = vpop.f32.mrb[0].mxu0
    %124 = vdwg.mxu0
    %vm125 = vcmp.gt.f32.partialorder %v122, 0.0
    %v126 = vlaneseq
    %v127 = vshrl.u32 %v126, 7
    %v128 = vsub.s32 0, %v127
    %v129 = vrot.slane %v50, %v128
    %v130 = vmul.f32 %v129, %v122
    %v131 = vsel %vm125, %v122, %v130
    %s132 = scalar_lea.vmem [#allocation2], 128
    %v133 = vld [vmem:[%s132] sm:$0xff]
    %v134 = vld [vmem:[%s132 + $0x8] sm:$0xff]
    %v135 = vld [vmem:[%s132 + $0x10] sm:$0xff]
    %v136 = vld [vmem:[%s132 + $0x18] sm:$0xff]
    %v137 = vld [vmem:[%s132 + $0x20] sm:$0xff]
    %v138 = vld [vmem:[%s132 + $0x28] sm:$0xff]
    %v139 = vld [vmem:[%s132 + $0x30] sm:$0xff]
    %v140 = vld [vmem:[%s132 + $0x38] sm:$0xff]
    %v141 = vld [vmem:[%s132 + $0x40] sm:$0xff]
    %v142 = vld [vmem:[%s132 + $0x48] sm:$0xff]
    %v143 = vld [vmem:[%s132 + $0x50] sm:$0xff]
    %v144 = vld [vmem:[%s132 + $0x58] sm:$0xff]
    %v145 = vld [vmem:[%s132 + $0x60] sm:$0xff]
    %v146 = vld [vmem:[%s132 + $0x68] sm:$0xff]
    %v147 = vld [vmem:[%s132 + $0x70] sm:$0xff]
    %v148 = vld [vmem:[%s132 + $0x78] sm:$0xff]
    %v149 = vld [vmem:[%s2 + $0x1] sm:$0x1]
    %v150 = vld [vmem:[%s3 + $0x1] sm:$0x1]
    %v151 = vlaneseq
    %v152 = vshrl.u32 %v151, 7
    %v153 = vsub.s32 0, %v152
    %v154 = vrot.slane %v149, %v153
    %155 = vmatprep.subr.mxu0 0.0
    %156 = vmatpush1.msra.mxu0 %v133
    %157 = vmatprep.subr.mxu0 0.0
    %158 = vmatpush1.msra.mxu0 %v134
    %159 = vmatprep.subr.mxu0 0.0
    %160 = vmatpush1.msra.mxu0 %v135
    %161 = vmatprep.subr.mxu0 0.0
    %162 = vmatpush1.msra.mxu0 %v136
    %163 = vmatprep.subr.mxu0 0.0
    %164 = vmatpush1.msra.mxu0 %v137
    %165 = vmatprep.subr.mxu0 0.0
    %166 = vmatpush1.msra.mxu0 %v138
    %167 = vmatprep.subr.mxu0 0.0
    %168 = vmatpush1.msra.mxu0 %v139
    %169 = vmatprep.subr.mxu0 0.0
    %170 = vmatpush1.msra.mxu0 %v140
    %171 = vmatprep.subr.mxu0 0.0
    %172 = vmatpush1.msra.mxu0 %v141
    %173 = vmatprep.subr.mxu0 0.0
    %174 = vmatpush1.msra.mxu0 %v142
    %175 = vmatprep.subr.mxu0 0.0
    %176 = vmatpush1.msra.mxu0 %v143
    %177 = vmatprep.subr.mxu0 0.0
    %178 = vmatpush1.msra.mxu0 %v144
    %179 = vmatprep.subr.mxu0 0.0
    %180 = vmatpush1.msra.mxu0 %v145
    %181 = vmatprep.subr.mxu0 0.0
    %182 = vmatpush1.msra.mxu0 %v146
    %183 = vmatprep.subr.mxu0 0.0
    %184 = vmatpush1.msra.mxu0 %v147
    %185 = vmatprep.subr.mxu0 0.0
    %186 = vmatpush1.msra.mxu0 %v148
    %187 = vmatprep.subr.mxu0 0.0
    %188 = vmatpush1.msra.mxu0 0.0
    %189 = vmatprep.subr.mxu0 0.0
    %190 = vmatpush1.msra.mxu0 0.0
    %191 = vmatprep.subr.mxu0 0.0
    %192 = vmatpush1.msra.mxu0 0.0
    %193 = vmatprep.subr.mxu0 0.0
    %194 = vmatpush1.msra.mxu0 0.0
    %195 = vmatprep.subr.mxu0 0.0
    %196 = vmatpush1.msra.mxu0 0.0
    %197 = vmatprep.subr.mxu0 0.0
    %198 = vmatpush1.msra.mxu0 0.0
    %199 = vmatprep.subr.mxu0 0.0
    %200 = vmatpush1.msra.mxu0 0.0
    %201 = vmatprep.subr.mxu0 0.0
    %202 = vmatpush1.msra.mxu0 0.0
    %203 = vmatprep.subr.mxu0 0.0
    %204 = vmatpush1.msra.mxu0 0.0
    %205 = vmatprep.subr.mxu0 0.0
    %206 = vmatpush1.msra.mxu0 0.0
    %207 = vmatprep.subr.mxu0 0.0
    %208 = vmatpush1.msra.mxu0 0.0
    %209 = vmatprep.subr.mxu0 0.0
    %210 = vmatpush1.msra.mxu0 0.0
    %211 = vmatprep.subr.mxu0 0.0
    %212 = vmatpush1.msra.mxu0 0.0
    %213 = vmatprep.subr.mxu0 0.0
    %214 = vmatpush1.msra.mxu0 0.0
    %215 = vmatprep.subr.mxu0 0.0
    %216 = vmatpush1.msra.mxu0 0.0
    %217 = vmatprep.subr.mxu0 0.0
    %218 = vmatpush1.msra.mxu0 0.0
    %219 = vmatprep.mubr.f32.mxu0 0.0
    %220 = vmatmul.mubr.f32.gmra.mrb[0].mxu0 %v131
    %v221 = vpop.f32.mrb[0].mxu0
    %v222 = vadd.f32 %v154, %v221
    %v223 = vpop.f32.mrb[0].mxu0
    %224 = vdwg.mxu0
    %vm225 = vcmp.gt.f32.partialorder %v222, 0.0
    %v226 = vlaneseq
    %v227 = vshrl.u32 %v226, 7
    %v228 = vsub.s32 0, %v227
    %v229 = vrot.slane %v150, %v228
    %v230 = vmul.f32 %v229, %v222
    %v231 = vsel %vm225, %v222, %v230
    %s232 = scalar_lea.vmem [#allocation2], 256
    %v233 = vld [vmem:[%s232] sm:$0xff]
    %v234 = vld [vmem:[%s232 + $0x8] sm:$0xff]
    %v235 = vld [vmem:[%s232 + $0x10] sm:$0xff]
    %v236 = vld [vmem:[%s232 + $0x18] sm:$0xff]
    %v237 = vld [vmem:[%s232 + $0x20] sm:$0xff]
    %v238 = vld [vmem:[%s232 + $0x28] sm:$0xff]
    %v239 = vld [vmem:[%s232 + $0x30] sm:$0xff]
    %v240 = vld [vmem:[%s232 + $0x38] sm:$0xff]
    %v241 = vld [vmem:[%s232 + $0x40] sm:$0xff]
    %v242 = vld [vmem:[%s232 + $0x48] sm:$0xff]
    %v243 = vld [vmem:[%s232 + $0x50] sm:$0xff]
    %v244 = vld [vmem:[%s232 + $0x58] sm:$0xff]
    %v245 = vld [vmem:[%s232 + $0x60] sm:$0xff]
    %v246 = vld [vmem:[%s232 + $0x68] sm:$0xff]
    %v247 = vld [vmem:[%s232 + $0x70] sm:$0xff]
    %v248 = vld [vmem:[%s232 + $0x78] sm:$0xff]
    %v249 = vld [vmem:[%s2 + $0x2] sm:$0x1]
    %v250 = vld [vmem:[%s3 + $0x2] sm:$0x1]
    %v251 = vlaneseq
    %v252 = vshrl.u32 %v251, 7
    %v253 = vsub.s32 0, %v252
    %v254 = vrot.slane %v249, %v253
    %255 = vmatprep.subr.mxu0 0.0
    %256 = vmatpush1.msra.mxu0 %v233
    %257 = vmatprep.subr.mxu0 0.0
    %258 = vmatpush1.msra.mxu0 %v234
    %259 = vmatprep.subr.mxu0 0.0
    %260 = vmatpush1.msra.mxu0 %v235
    %261 = vmatprep.subr.mxu0 0.0
    %262 = vmatpush1.msra.mxu0 %v236
    %263 = vmatprep.subr.mxu0 0.0
    %264 = vmatpush1.msra.mxu0 %v237
    %265 = vmatprep.subr.mxu0 0.0
    %266 = vmatpush1.msra.mxu0 %v238
    %267 = vmatprep.subr.mxu0 0.0
    %268 = vmatpush1.msra.mxu0 %v239
    %269 = vmatprep.subr.mxu0 0.0
    %270 = vmatpush1.msra.mxu0 %v240
    %271 = vmatprep.subr.mxu0 0.0
    %272 = vmatpush1.msra.mxu0 %v241
    %273 = vmatprep.subr.mxu0 0.0
    %274 = vmatpush1.msra.mxu0 %v242
    %275 = vmatprep.subr.mxu0 0.0
    %276 = vmatpush1.msra.mxu0 %v243
    %277 = vmatprep.subr.mxu0 0.0
    %278 = vmatpush1.msra.mxu0 %v244
    %279 = vmatprep.subr.mxu0 0.0
    %280 = vmatpush1.msra.mxu0 %v245
    %281 = vmatprep.subr.mxu0 0.0
    %282 = vmatpush1.msra.mxu0 %v246
    %283 = vmatprep.subr.mxu0 0.0
    %284 = vmatpush1.msra.mxu0 %v247
    %285 = vmatprep.subr.mxu0 0.0
    %286 = vmatpush1.msra.mxu0 %v248
    %287 = vmatprep.subr.mxu0 0.0
    %288 = vmatpush1.msra.mxu0 0.0
    %289 = vmatprep.subr.mxu0 0.0
    %290 = vmatpush1.msra.mxu0 0.0
    %291 = vmatprep.subr.mxu0 0.0
    %292 = vmatpush1.msra.mxu0 0.0
    %293 = vmatprep.subr.mxu0 0.0
    %294 = vmatpush1.msra.mxu0 0.0
    %295 = vmatprep.subr.mxu0 0.0
    %296 = vmatpush1.msra.mxu0 0.0
    %297 = vmatprep.subr.mxu0 0.0
    %298 = vmatpush1.msra.mxu0 0.0
    %299 = vmatprep.subr.mxu0 0.0
    %300 = vmatpush1.msra.mxu0 0.0
    %301 = vmatprep.subr.mxu0 0.0
    %302 = vmatpush1.msra.mxu0 0.0
    %303 = vmatprep.subr.mxu0 0.0
    %304 = vmatpush1.msra.mxu0 0.0
    %305 = vmatprep.subr.mxu0 0.0
    %306 = vmatpush1.msra.mxu0 0.0
    %307 = vmatprep.subr.mxu0 0.0
    %308 = vmatpush1.msra.mxu0 0.0
    %309 = vmatprep.subr.mxu0 0.0
    %310 = vmatpush1.msra.mxu0 0.0
    %311 = vmatprep.subr.mxu0 0.0
    %312 = vmatpush1.msra.mxu0 0.0
    %313 = vmatprep.subr.mxu0 0.0
    %314 = vmatpush1.msra.mxu0 0.0
    %315 = vmatprep.subr.mxu0 0.0
    %316 = vmatpush1.msra.mxu0 0.0
    %317 = vmatprep.subr.mxu0 0.0
    %318 = vmatpush1.msra.mxu0 0.0
    %319 = vmatprep.mubr.f32.mxu0 0.0
    %320 = vmatmul.mubr.f32.gmra.mrb[0].mxu0 %v231
    %v321 = vpop.f32.mrb[0].mxu0
    %v322 = vadd.f32 %v254, %v321
    %v323 = vpop.f32.mrb[0].mxu0
    %324 = vdwg.mxu0
    %vm325 = vcmp.gt.f32.partialorder %v322, 0.0
    %v326 = vlaneseq
    %v327 = vshrl.u32 %v326, 7
    %v328 = vsub.s32 0, %v327
    %v329 = vrot.slane %v250, %v328
    %v330 = vmul.f32 %v329, %v322
    %v331 = vsel %vm325, %v322, %v330
    %s332 = scalar_lea.vmem [#allocation2], 384
    %v333 = vld [vmem:[%s332] sm:$0xff]
    %v334 = vld [vmem:[%s332 + $0x8] sm:$0xff]
    %v335 = vld [vmem:[%s332 + $0x10] sm:$0xff]
    %v336 = vld [vmem:[%s332 + $0x18] sm:$0xff]
    %v337 = vld [vmem:[%s332 + $0x20] sm:$0xff]
    %v338 = vld [vmem:[%s332 + $0x28] sm:$0xff]
    %v339 = vld [vmem:[%s332 + $0x30] sm:$0xff]
    %v340 = vld [vmem:[%s332 + $0x38] sm:$0xff]
    %v341 = vld [vmem:[%s332 + $0x40] sm:$0xff]
    %v342 = vld [vmem:[%s332 + $0x48] sm:$0xff]
    %v343 = vld [vmem:[%s332 + $0x50] sm:$0xff]
    %v344 = vld [vmem:[%s332 + $0x58] sm:$0xff]
    %v345 = vld [vmem:[%s332 + $0x60] sm:$0xff]
    %v346 = vld [vmem:[%s332 + $0x68] sm:$0xff]
    %v347 = vld [vmem:[%s332 + $0x70] sm:$0xff]
    %v348 = vld [vmem:[%s332 + $0x78] sm:$0xff]
    %v349 = vld [vmem:[%s2 + $0x3] sm:$0x1]
    %v350 = vld [vmem:[%s3 + $0x3] sm:$0x1]
    %v351 = vlaneseq
    %v352 = vshrl.u32 %v351, 7
    %v353 = vsub.s32 0, %v352
    %v354 = vrot.slane %v349, %v353
    %355 = vmatprep.subr.mxu0 0.0
    %356 = vmatpush1.msra.mxu0 %v333
    %357 = vmatprep.subr.mxu0 0.0
    %358 = vmatpush1.msra.mxu0 %v334
    %359 = vmatprep.subr.mxu0 0.0
    %360 = vmatpush1.msra.mxu0 %v335
    %361 = vmatprep.subr.mxu0 0.0
    %362 = vmatpush1.msra.mxu0 %v336
    %363 = vmatprep.subr.mxu0 0.0
    %364 = vmatpush1.msra.mxu0 %v337
    %365 = vmatprep.subr.mxu0 0.0
    %366 = vmatpush1.msra.mxu0 %v338
    %367 = vmatprep.subr.mxu0 0.0
    %368 = vmatpush1.msra.mxu0 %v339
    %369 = vmatprep.subr.mxu0 0.0
    %370 = vmatpush1.msra.mxu0 %v340
    %371 = vmatprep.subr.mxu0 0.0
    %372 = vmatpush1.msra.mxu0 %v341
    %373 = vmatprep.subr.mxu0 0.0
    %374 = vmatpush1.msra.mxu0 %v342
    %375 = vmatprep.subr.mxu0 0.0
    %376 = vmatpush1.msra.mxu0 %v343
    %377 = vmatprep.subr.mxu0 0.0
    %378 = vmatpush1.msra.mxu0 %v344
    %379 = vmatprep.subr.mxu0 0.0
    %380 = vmatpush1.msra.mxu0 %v345
    %381 = vmatprep.subr.mxu0 0.0
    %382 = vmatpush1.msra.mxu0 %v346
    %383 = vmatprep.subr.mxu0 0.0
    %384 = vmatpush1.msra.mxu0 %v347
    %385 = vmatprep.subr.mxu0 0.0
    %386 = vmatpush1.msra.mxu0 %v348
    %387 = vmatprep.subr.mxu0 0.0
    %388 = vmatpush1.msra.mxu0 0.0
    %389 = vmatprep.subr.mxu0 0.0
    %390 = vmatpush1.msra.mxu0 0.0
    %391 = vmatprep.subr.mxu0 0.0
    %392 = vmatpush1.msra.mxu0 0.0
    %393 = vmatprep.subr.mxu0 0.0
    %394 = vmatpush1.msra.mxu0 0.0
    %395 = vmatprep.subr.mxu0 0.0
    %396 = vmatpush1.msra.mxu0 0.0
    %397 = vmatprep.subr.mxu0 0.0
    %398 = vmatpush1.msra.mxu0 0.0
    %399 = vmatprep.subr.mxu0 0.0
    %400 = vmatpush1.msra.mxu0 0.0
    %401 = vmatprep.subr.mxu0 0.0
    %402 = vmatpush1.msra.mxu0 0.0
    %403 = vmatprep.subr.mxu0 0.0
    %404 = vmatpush1.msra.mxu0 0.0
    %405 = vmatprep.subr.mxu0 0.0
    %406 = vmatpush1.msra.mxu0 0.0
    %407 = vmatprep.subr.mxu0 0.0
    %408 = vmatpush1.msra.mxu0 0.0
    %409 = vmatprep.subr.mxu0 0.0
    %410 = vmatpush1.msra.mxu0 0.0
    %411 = vmatprep.subr.mxu0 0.0
    %412 = vmatpush1.msra.mxu0 0.0
    %413 = vmatprep.subr.mxu0 0.0
    %414 = vmatpush1.msra.mxu0 0.0
    %415 = vmatprep.subr.mxu0 0.0
    %416 = vmatpush1.msra.mxu0 0.0
    %417 = vmatprep.subr.mxu0 0.0
    %418 = vmatpush1.msra.mxu0 0.0
    %419 = vmatprep.mubr.f32.mxu0 0.0
    %420 = vmatmul.mubr.f32.gmra.mrb[0].mxu0 %v331
    %v421 = vpop.f32.mrb[0].mxu0
    %v422 = vadd.f32 %v354, %v421
    %v423 = vpop.f32.mrb[0].mxu0
    %424 = vdwg.mxu0
    %vm425 = vcmp.gt.f32.partialorder %v422, 0.0
    %v426 = vlaneseq
    %v427 = vshrl.u32 %v426, 7
    %v428 = vsub.s32 0, %v427
    %v429 = vrot.slane %v350, %v428
    %v430 = vmul.f32 %v429, %v422
    %v431 = vsel %vm425, %v422, %v430
    %s432 = scalar_lea.vmem [#allocation2], 512
    %v433 = vld [vmem:[%s432] sm:$0xff]
    %v434 = vld [vmem:[%s432 + $0x8] sm:$0xff]
    %v435 = vld [vmem:[%s432 + $0x10] sm:$0xff]
    %v436 = vld [vmem:[%s432 + $0x18] sm:$0xff]
    %v437 = vld [vmem:[%s432 + $0x20] sm:$0xff]
    %v438 = vld [vmem:[%s432 + $0x28] sm:$0xff]
    %v439 = vld [vmem:[%s432 + $0x30] sm:$0xff]
    %v440 = vld [vmem:[%s432 + $0x38] sm:$0xff]
    %v441 = vld [vmem:[%s432 + $0x40] sm:$0xff]
    %v442 = vld [vmem:[%s432 + $0x48] sm:$0xff]
    %v443 = vld [vmem:[%s432 + $0x50] sm:$0xff]
    %v444 = vld [vmem:[%s432 + $0x58] sm:$0xff]
    %v445 = vld [vmem:[%s432 + $0x60] sm:$0xff]
    %v446 = vld [vmem:[%s432 + $0x68] sm:$0xff]
    %v447 = vld [vmem:[%s432 + $0x70] sm:$0xff]
    %v448 = vld [vmem:[%s432 + $0x78] sm:$0xff]
    %v449 = vld [vmem:[%s2 + $0x4] sm:$0x1]
    %v450 = vld [vmem:[%s3 + $0x4] sm:$0x1]
    %v451 = vlaneseq
    %v452 = vshrl.u32 %v451, 7
    %v453 = vsub.s32 0, %v452
    %v454 = vrot.slane %v449, %v453
    %455 = vmatprep.subr.mxu0 0.0
    %456 = vmatpush1.msra.mxu0 %v433
    %457 = vmatprep.subr.mxu0 0.0
    %458 = vmatpush1.msra.mxu0 %v434
    %459 = vmatprep.subr.mxu0 0.0
    %460 = vmatpush1.msra.mxu0 %v435
    %461 = vmatprep.subr.mxu0 0.0
    %462 = vmatpush1.msra.mxu0 %v436
    %463 = vmatprep.subr.mxu0 0.0
    %464 = vmatpush1.msra.mxu0 %v437
    %465 = vmatprep.subr.mxu0 0.0
    %466 = vmatpush1.msra.mxu0 %v438
    %467 = vmatprep.subr.mxu0 0.0
    %468 = vmatpush1.msra.mxu0 %v439
    %469 = vmatprep.subr.mxu0 0.0
    %470 = vmatpush1.msra.mxu0 %v440
    %471 = vmatprep.subr.mxu0 0.0
    %472 = vmatpush1.msra.mxu0 %v441
    %473 = vmatprep.subr.mxu0 0.0
    %474 = vmatpush1.msra.mxu0 %v442
    %475 = vmatprep.subr.mxu0 0.0
    %476 = vmatpush1.msra.mxu0 %v443
    %477 = vmatprep.subr.mxu0 0.0
    %478 = vmatpush1.msra.mxu0 %v444
    %479 = vmatprep.subr.mxu0 0.0
    %480 = vmatpush1.msra.mxu0 %v445
    %481 = vmatprep.subr.mxu0 0.0
    %482 = vmatpush1.msra.mxu0 %v446
    %483 = vmatprep.subr.mxu0 0.0
    %484 = vmatpush1.msra.mxu0 %v447
    %485 = vmatprep.subr.mxu0 0.0
    %486 = vmatpush1.msra.mxu0 %v448
    %487 = vmatprep.subr.mxu0 0.0
    %488 = vmatpush1.msra.mxu0 0.0
    %489 = vmatprep.subr.mxu0 0.0
    %490 = vmatpush1.msra.mxu0 0.0
    %491 = vmatprep.subr.mxu0 0.0
    %492 = vmatpush1.msra.mxu0 0.0
    %493 = vmatprep.subr.mxu0 0.0
    %494 = vmatpush1.msra.mxu0 0.0
    %495 = vmatprep.subr.mxu0 0.0
    %496 = vmatpush1.msra.mxu0 0.0
    %497 = vmatprep.subr.mxu0 0.0
    %498 = vmatpush1.msra.mxu0 0.0
    %499 = vmatprep.subr.mxu0 0.0
    %500 = vmatpush1.msra.mxu0 0.0
    %501 = vmatprep.subr.mxu0 0.0
    %502 = vmatpush1.msra.mxu0 0.0
    %503 = vmatprep.subr.mxu0 0.0
    %504 = vmatpush1.msra.mxu0 0.0
    %505 = vmatprep.subr.mxu0 0.0
    %506 = vmatpush1.msra.mxu0 0.0
    %507 = vmatprep.subr.mxu0 0.0
    %508 = vmatpush1.msra.mxu0 0.0
    %509 = vmatprep.subr.mxu0 0.0
    %510 = vmatpush1.msra.mxu0 0.0
    %511 = vmatprep.subr.mxu0 0.0
    %512 = vmatpush1.msra.mxu0 0.0
    %513 = vmatprep.subr.mxu0 0.0
    %514 = vmatpush1.msra.mxu0 0.0
    %515 = vmatprep.subr.mxu0 0.0
    %516 = vmatpush1.msra.mxu0 0.0
    %517 = vmatprep.subr.mxu0 0.0
    %518 = vmatpush1.msra.mxu0 0.0
    %519 = vmatprep.mubr.f32.mxu0 0.0
    %520 = vmatmul.mubr.f32.gmra.mrb[0].mxu0 %v431
    %v521 = vpop.f32.mrb[0].mxu0
    %v522 = vadd.f32 %v454, %v521
    %v523 = vpop.f32.mrb[0].mxu0
    %524 = vdwg.mxu0
    %vm525 = vcmp.gt.f32.partialorder %v522, 0.0
    %v526 = vlaneseq
    %v527 = vshrl.u32 %v526, 7
    %v528 = vsub.s32 0, %v527
    %v529 = vrot.slane %v450, %v528
    %v530 = vmul.f32 %v529, %v522
    %v531 = vsel %vm525, %v522, %v530
    %s532 = scalar_lea.vmem [#allocation2], 640
    %v533 = vld [vmem:[%s532] sm:$0xff]
    %v534 = vld [vmem:[%s532 + $0x8] sm:$0xff]
    %v535 = vld [vmem:[%s532 + $0x10] sm:$0xff]
    %v536 = vld [vmem:[%s532 + $0x18] sm:$0xff]
    %v537 = vld [vmem:[%s532 + $0x20] sm:$0xff]
    %v538 = vld [vmem:[%s532 + $0x28] sm:$0xff]
    %v539 = vld [vmem:[%s532 + $0x30] sm:$0xff]
    %v540 = vld [vmem:[%s532 + $0x38] sm:$0xff]
    %v541 = vld [vmem:[%s532 + $0x40] sm:$0xff]
    %v542 = vld [vmem:[%s532 + $0x48] sm:$0xff]
    %v543 = vld [vmem:[%s532 + $0x50] sm:$0xff]
    %v544 = vld [vmem:[%s532 + $0x58] sm:$0xff]
    %v545 = vld [vmem:[%s532 + $0x60] sm:$0xff]
    %v546 = vld [vmem:[%s532 + $0x68] sm:$0xff]
    %v547 = vld [vmem:[%s532 + $0x70] sm:$0xff]
    %v548 = vld [vmem:[%s532 + $0x78] sm:$0xff]
    %v549 = vld [vmem:[%s2 + $0x5] sm:$0x1]
    %v550 = vld [vmem:[%s3 + $0x5] sm:$0x1]
    %v551 = vlaneseq
    %v552 = vshrl.u32 %v551, 7
    %v553 = vsub.s32 0, %v552
    %v554 = vrot.slane %v549, %v553
    %555 = vmatprep.subr.mxu0 0.0
    %556 = vmatpush1.msra.mxu0 %v533
    %557 = vmatprep.subr.mxu0 0.0
    %558 = vmatpush1.msra.mxu0 %v534
    %559 = vmatprep.subr.mxu0 0.0
    %560 = vmatpush1.msra.mxu0 %v535
    %561 = vmatprep.subr.mxu0 0.0
    %562 = vmatpush1.msra.mxu0 %v536
    %563 = vmatprep.subr.mxu0 0.0
    %564 = vmatpush1.msra.mxu0 %v537
    %565 = vmatprep.subr.mxu0 0.0
    %566 = vmatpush1.msra.mxu0 %v538
    %567 = vmatprep.subr.mxu0 0.0
    %568 = vmatpush1.msra.mxu0 %v539
    %569 = vmatprep.subr.mxu0 0.0
    %570 = vmatpush1.msra.mxu0 %v540
    %571 = vmatprep.subr.mxu0 0.0
    %572 = vmatpush1.msra.mxu0 %v541
    %573 = vmatprep.subr.mxu0 0.0
    %574 = vmatpush1.msra.mxu0 %v542
    %575 = vmatprep.subr.mxu0 0.0
    %576 = vmatpush1.msra.mxu0 %v543
    %577 = vmatprep.subr.mxu0 0.0
    %578 = vmatpush1.msra.mxu0 %v544
    %579 = vmatprep.subr.mxu0 0.0
    %580 = vmatpush1.msra.mxu0 %v545
    %581 = vmatprep.subr.mxu0 0.0
    %582 = vmatpush1.msra.mxu0 %v546
    %583 = vmatprep.subr.mxu0 0.0
    %584 = vmatpush1.msra.mxu0 %v547
    %585 = vmatprep.subr.mxu0 0.0
    %586 = vmatpush1.msra.mxu0 %v548
    %587 = vmatprep.subr.mxu0 0.0
    %588 = vmatpush1.msra.mxu0 0.0
    %589 = vmatprep.subr.mxu0 0.0
    %590 = vmatpush1.msra.mxu0 0.0
    %591 = vmatprep.subr.mxu0 0.0
    %592 = vmatpush1.msra.mxu0 0.0
    %593 = vmatprep.subr.mxu0 0.0
    %594 = vmatpush1.msra.mxu0 0.0
    %595 = vmatprep.subr.mxu0 0.0
    %596 = vmatpush1.msra.mxu0 0.0
    %597 = vmatprep.subr.mxu0 0.0
    %598 = vmatpush1.msra.mxu0 0.0
    %599 = vmatprep.subr.mxu0 0.0
    %600 = vmatpush1.msra.mxu0 0.0
    %601 = vmatprep.subr.mxu0 0.0
    %602 = vmatpush1.msra.mxu0 0.0
    %603 = vmatprep.subr.mxu0 0.0
    %604 = vmatpush1.msra.mxu0 0.0
    %605 = vmatprep.subr.mxu0 0.0
    %606 = vmatpush1.msra.mxu0 0.0
    %607 = vmatprep.subr.mxu0 0.0
    %608 = vmatpush1.msra.mxu0 0.0
    %609 = vmatprep.subr.mxu0 0.0
    %610 = vmatpush1.msra.mxu0 0.0
    %611 = vmatprep.subr.mxu0 0.0
    %612 = vmatpush1.msra.mxu0 0.0
    %613 = vmatprep.subr.mxu0 0.0
    %614 = vmatpush1.msra.mxu0 0.0
    %615 = vmatprep.subr.mxu0 0.0
    %616 = vmatpush1.msra.mxu0 0.0
    %617 = vmatprep.subr.mxu0 0.0
    %618 = vmatpush1.msra.mxu0 0.0
    %619 = vmatprep.mubr.f32.mxu0 0.0
    %620 = vmatmul.mubr.f32.gmra.mrb[0].mxu0 %v531
    %v621 = vpop.f32.mrb[0].mxu0
    %v622 = vadd.f32 %v554, %v621
    %v623 = vpop.f32.mrb[0].mxu0
    %624 = vdwg.mxu0
    %vm625 = vcmp.gt.f32.partialorder %v622, 0.0
    %v626 = vlaneseq
    %v627 = vshrl.u32 %v626, 7
    %v628 = vsub.s32 0, %v627
    %v629 = vrot.slane %v550, %v628
    %v630 = vmul.f32 %v629, %v622
    %v631 = vsel %vm625, %v622, %v630
    %s632 = scalar_lea.vmem [#allocation2], 768
    %v633 = vld [vmem:[%s632] sm:$0xff]
    %v634 = vld [vmem:[%s632 + $0x8] sm:$0xff]
    %v635 = vld [vmem:[%s632 + $0x10] sm:$0xff]
    %v636 = vld [vmem:[%s632 + $0x18] sm:$0xff]
    %v637 = vld [vmem:[%s632 + $0x20] sm:$0xff]
    %v638 = vld [vmem:[%s632 + $0x28] sm:$0xff]
    %v639 = vld [vmem:[%s632 + $0x30] sm:$0xff]
    %v640 = vld [vmem:[%s632 + $0x38] sm:$0xff]
    %v641 = vld [vmem:[%s632 + $0x40] sm:$0xff]
    %v642 = vld [vmem:[%s632 + $0x48] sm:$0xff]
    %v643 = vld [vmem:[%s632 + $0x50] sm:$0xff]
    %v644 = vld [vmem:[%s632 + $0x58] sm:$0xff]
    %v645 = vld [vmem:[%s632 + $0x60] sm:$0xff]
    %v646 = vld [vmem:[%s632 + $0x68] sm:$0xff]
    %v647 = vld [vmem:[%s632 + $0x70] sm:$0xff]
    %v648 = vld [vmem:[%s632 + $0x78] sm:$0xff]
    %v649 = vld [vmem:[%s2 + $0x6] sm:$0x1]
    %v650 = vlaneseq
    %v651 = vshrl.u32 %v650, 7
    %v652 = vsub.s32 0, %v651
    %v653 = vrot.slane %v649, %v652
    %654 = vmatprep.subr.mxu0 0.0
    %655 = vmatpush1.msra.mxu0 %v633
    %656 = vmatprep.subr.mxu0 0.0
    %657 = vmatpush1.msra.mxu0 %v634
    %658 = vmatprep.subr.mxu0 0.0
    %659 = vmatpush1.msra.mxu0 %v635
    %660 = vmatprep.subr.mxu0 0.0
    %661 = vmatpush1.msra.mxu0 %v636
    %662 = vmatprep.subr.mxu0 0.0
    %663 = vmatpush1.msra.mxu0 %v637
    %664 = vmatprep.subr.mxu0 0.0
    %665 = vmatpush1.msra.mxu0 %v638
    %666 = vmatprep.subr.mxu0 0.0
    %667 = vmatpush1.msra.mxu0 %v639
    %668 = vmatprep.subr.mxu0 0.0
    %669 = vmatpush1.msra.mxu0 %v640
    %670 = vmatprep.subr.mxu0 0.0
    %671 = vmatpush1.msra.mxu0 %v641
    %672 = vmatprep.subr.mxu0 0.0
    %673 = vmatpush1.msra.mxu0 %v642
    %674 = vmatprep.subr.mxu0 0.0
    %675 = vmatpush1.msra.mxu0 %v643
    %676 = vmatprep.subr.mxu0 0.0
    %677 = vmatpush1.msra.mxu0 %v644
    %678 = vmatprep.subr.mxu0 0.0
    %679 = vmatpush1.msra.mxu0 %v645
    %680 = vmatprep.subr.mxu0 0.0
    %681 = vmatpush1.msra.mxu0 %v646
    %682 = vmatprep.subr.mxu0 0.0
    %683 = vmatpush1.msra.mxu0 %v647
    %684 = vmatprep.subr.mxu0 0.0
    %685 = vmatpush1.msra.mxu0 %v648
    %686 = vmatprep.subr.mxu0 0.0
    %687 = vmatpush1.msra.mxu0 0.0
    %688 = vmatprep.subr.mxu0 0.0
    %689 = vmatpush1.msra.mxu0 0.0
    %690 = vmatprep.subr.mxu0 0.0
    %691 = vmatpush1.msra.mxu0 0.0
    %692 = vmatprep.subr.mxu0 0.0
    %693 = vmatpush1.msra.mxu0 0.0
    %694 = vmatprep.subr.mxu0 0.0
    %695 = vmatpush1.msra.mxu0 0.0
    %696 = vmatprep.subr.mxu0 0.0
    %697 = vmatpush1.msra.mxu0 0.0
    %698 = vmatprep.subr.mxu0 0.0
    %699 = vmatpush1.msra.mxu0 0.0
    %700 = vmatprep.subr.mxu0 0.0
    %701 = vmatpush1.msra.mxu0 0.0
    %702 = vmatprep.subr.mxu0 0.0
    %703 = vmatpush1.msra.mxu0 0.0
    %704 = vmatprep.subr.mxu0 0.0
    %705 = vmatpush1.msra.mxu0 0.0
    %706 = vmatprep.subr.mxu0 0.0
    %707 = vmatpush1.msra.mxu0 0.0
    %708 = vmatprep.subr.mxu0 0.0
    %709 = vmatpush1.msra.mxu0 0.0
    %710 = vmatprep.subr.mxu0 0.0
    %711 = vmatpush1.msra.mxu0 0.0
    %712 = vmatprep.subr.mxu0 0.0
    %713 = vmatpush1.msra.mxu0 0.0
    %714 = vmatprep.subr.mxu0 0.0
    %715 = vmatpush1.msra.mxu0 0.0
    %716 = vmatprep.subr.mxu0 0.0
    %717 = vmatpush1.msra.mxu0 0.0
    %718 = vmatprep.mubr.f32.mxu0 0.0
    %719 = vmatmul.mubr.f32.gmra.mrb[0].mxu0 %v631
    %v720 = vpop.f32.mrb[0].mxu0
    %v721 = vadd.f32 %v653, %v720
    %v722 = vpop.f32.mrb[0].mxu0
    %723 = vdwg.mxu0
    %724 = vst [vmem:[#allocation5] sm:$0xff] %v721
    // Predicated region
    $region22: #{net_forward.1} parent=1 // pred_check
      _
    $region23: #{net_forward.1} parent=1 // pred_check_branch
      %726 = sbr.rel (0) target = $region25
    $region24: #{net_forward.1} parent=1 // pred_region
      %s728 = ssub.s32 128, 128
      %729 = vsyncadd [#allocation4], %s728
      %s731 = sshll.u32 [#allocation5], 4
      %s732 = int_to_ptr.vmem [resolvable:$true] %s731
      %734 = dma.vmem_to_hbm [thread:$0]  %s732, 128, %s4, [#allocation4]
    $region25: #{net_forward.1} parent=1 // pred_fallthru
      _
    // Predicated region
    $region26: #{net_forward.1} parent=1 // pred_check
      _
    $region27: #{net_forward.1} parent=1 // pred_check_branch
      %736 = sbr.rel (0) target = $region29
    $region28: #{net_forward.1} parent=1 // pred_region
      %737 = dma.done [#allocation4], 128
    $region29: #{net_forward.1} parent=1 // pred_fallthru
      _
    %738 = vsyncpa [#allocation3], 1
    %739 = vsyncpa [#allocation4], 1

</llo_original>
